<compile_context>
chip_gen: v5e
topology: v5e:2x2
jax: 0.10.0
libtpu: 0.0.40
codegen_flags: <defaults>
</compile_context>

<pallas_src>
import numpy as np
import jax
import jax.numpy as jnp
from jax.experimental import pallas as pl
from jax.experimental.pallas import tpu as pltpu

D_MODEL = 128
N_HEAD = 4
HEAD_DIM = D_MODEL // N_HEAD
MAX_LEN = 200
LN_EPS = 1e-5
CLS_PAD = 128          # lane-dense classifier / output padding


def attention_classifier_kernel(
    x_ref,       # (bB, S, D)   embedded tokens (pre pos-enc) for this batch block
    pe_ref,      # (S, D)       positional-encoding slice (last S rows of pe)
    w_kv_ref,    # (D, 2D)      in_proj_weight[D:].T   (K and V projections, fused)
    b_kv_ref,    # (1, 2D)      in_proj_bias[D:]
    w_q_ref,     # (D, D)       in_proj_weight[:D].T * (1/sqrt(dh))   (scale folded)
    b_q_ref,     # (1, D)       in_proj_bias[:D]    * (1/sqrt(dh))
    hsel_ref,    # (H, D)       one-hot head selector: hsel[h, d] = (d // dh == h)
    w_out_ref,   # (D, D)       out_proj.weight.T
    b_out_ref,   # (1, D)       out_proj.bias
    ln_g_ref,    # (1, D)       LayerNorm gamma
    ln_b_ref,    # (1, D)       LayerNorm beta
    w_cls_ref,   # (D, 128)     classifier.weight.T padded to 128 lanes (col 0 real)
    b_cls_ref,   # (1, 128)     classifier.bias padded (col 0 real)
    o_ref,       # (bB, 128)    logits slab; column 0 holds the real logit
):
    bB, S, D = x_ref.shape

    # positional encoding: x + pe[-S:]
    x = x_ref[...] + pe_ref[...][None, :, :]                           # (bB, S, D)

    # K/V projection for every position (one fused MXU matmul).
    kv = jnp.dot(x.reshape(bB * S, D), w_kv_ref[...],
                 preferred_element_type=jnp.float32) + b_kv_ref[...]   # (bB*S, 2D)
    k = kv[:, :D].reshape(bB, S, D)
    v = kv[:, D:].reshape(bB, S, D)

    # Q only for the last token (the only query whose output is used).
    x_last = x[:, S - 1, :]                                            # (bB, D)
    q = jnp.dot(x_last, w_q_ref[...],
                preferred_element_type=jnp.float32) + b_q_ref[...]     # pre-scaled

    # Per-head scores for the single query: zero out other heads' lanes of q via
    # the one-hot selector, then one batched matmul against K -> (bB, H, S).
    # No causal mask: the last query sees all keys.
    qh = q[:, None, :] * hsel_ref[...][None, :, :]                     # (bB, H, D)
    s = jnp.einsum('bhd,bkd->bhk', qh, k,
                   preferred_element_type=jnp.float32)                 # (bB, H, S)

    # softmax over keys (lane axis); reciprocal on the EUP slot
    m = jnp.max(s, axis=-1, keepdims=True)
    p = jnp.exp(s - m)
    p = p * pl.reciprocal(jnp.sum(p, axis=-1, keepdims=True), approx=True)

    # context: batched (H, S) @ (S, D), then keep each head's own dh lanes.
    ctx_h = jnp.einsum('bhk,bkd->bhd', p, v,
                       preferred_element_type=jnp.float32)             # (bB, H, D)
    ctx = jnp.sum(ctx_h * hsel_ref[...][None, :, :], axis=1)           # (bB, D)

    # output projection (last token only)
    attn_last = jnp.dot(ctx, w_out_ref[...],
                        preferred_element_type=jnp.float32) + b_out_ref[...]

    # LayerNorm (per-position, so applying it to the last token only is exact)
    mu = jnp.mean(attn_last, axis=-1, keepdims=True)
    var = jnp.mean((attn_last - mu) ** 2, axis=-1, keepdims=True)
    normed = (attn_last - mu) * jax.lax.rsqrt(var + LN_EPS)
    normed = normed * ln_g_ref[...] + ln_b_ref[...]

    # classifier head (dropout = identity at inference); lane-dense store
    o_ref[...] = jnp.dot(normed, w_cls_ref[...],
                         preferred_element_type=jnp.float32) + b_cls_ref[...]


def make_positional_encoding(d_model=D_MODEL, max_len=MAX_LEN):
    pos = jnp.arange(max_len, dtype=jnp.float32)[:, None]               # (L, 1)
    div = jnp.exp(jnp.arange(0, d_model, 2, dtype=jnp.float32)
                  * (-np.log(10000.0) / d_model))                       # (D/2,)
    sin = jnp.sin(pos * div)
    cos = jnp.cos(pos * div)
    # interleave -> pe[:, 0::2] = sin, pe[:, 1::2] = cos
    pe = jnp.stack([sin, cos], axis=-1).reshape(max_len, d_model)
    return pe


def init_torch_style_params(key, vocab_size, d_model=D_MODEL):
    ks = jax.random.split(key, 6)
    s = 0.05
    return {
        "embedding": jax.random.normal(ks[0], (vocab_size, d_model), jnp.float32),
        "in_proj_weight": jax.random.normal(ks[1], (3 * d_model, d_model), jnp.float32) * s,
        "in_proj_bias": jax.random.normal(ks[2], (3 * d_model,), jnp.float32) * s,
        "out_proj_weight": jax.random.normal(ks[3], (d_model, d_model), jnp.float32) * s,
        "out_proj_bias": jax.random.normal(ks[4], (d_model,), jnp.float32) * s,
        "ln_gamma": jnp.ones((d_model,), jnp.float32),
        "ln_beta": jnp.zeros((d_model,), jnp.float32),
        "cls_weight": jax.random.normal(ks[5], (1, d_model), jnp.float32) * s,
        "cls_bias": jnp.zeros((1,), jnp.float32),
        "pe": make_positional_encoding(d_model),
    }


def pack_kernel_params(tp, d_model=D_MODEL, n_head=N_HEAD):
    """Host-side weight prep: split QKV, fold 1/sqrt(dh) into the Q projection,
    pre-transpose for row-major x @ W, pad the classifier to 128 lanes, and
    build the one-hot per-head lane selector."""
    D, H, dh = d_model, n_head, d_model // n_head
    scale = 1.0 / np.sqrt(dh)
    w_in, b_in = tp["in_proj_weight"], tp["in_proj_bias"]

    head_sel = (np.arange(D)[None, :] // dh == np.arange(H)[:, None]).astype(np.float32)

    w_cls_pad = jnp.zeros((D, CLS_PAD), jnp.float32).at[:, 0].set(tp["cls_weight"][0])
    b_cls_pad = jnp.zeros((1, CLS_PAD), jnp.float32).at[0, 0].set(tp["cls_bias"][0])

    return {
        "embedding": tp["embedding"],
        "pe": tp["pe"],
        "w_q_t": w_in[:D].T * scale,                    # (D, D), scale folded
        "b_q": (b_in[:D] * scale).reshape(1, D),
        "w_kv_t": w_in[D:].T,                           # (D, 2D)
        "b_kv": b_in[D:].reshape(1, 2 * D),
        "head_sel": jnp.asarray(head_sel),              # (H, D)
        "w_out_t": tp["out_proj_weight"].T,             # (D, D)
        "b_out": tp["out_proj_bias"].reshape(1, D),
        "ln_g": tp["ln_gamma"].reshape(1, D),
        "ln_b": tp["ln_beta"].reshape(1, D),
        "w_cls_pad": w_cls_pad,                         # (D, 128)
        "b_cls_pad": b_cls_pad,                         # (1, 128)
    }


def attention_classifier_forward(tokens, params, batch_tile=8):
    B, S = tokens.shape
    D, H = D_MODEL, N_HEAD

    # embedding lookup (gather) kept as JAX glue outside the kernel
    emb = params["embedding"][tokens]                   # (B, S, D)
    pe_slice = params["pe"][MAX_LEN - S:, :]            # pe[:, -S:, :] semantics

    bB = min(batch_tile, B)
    nb = (B + bB - 1) // bB
    B_pad = nb * bB
    if B_pad != B:
        emb = jnp.pad(emb, ((0, B_pad - B), (0, 0), (0, 0)))

    def const2(shape):                                  # resident (un-gridded) operand
        return pl.BlockSpec(shape, lambda i: (0, 0))

    out = pl.pallas_call(
        attention_classifier_kernel,
        out_shape=jax.ShapeDtypeStruct((B_pad, CLS_PAD), jnp.float32),
        grid_spec=pltpu.PrefetchScalarGridSpec(
            num_scalar_prefetch=0,
            grid=(nb,),
            in_specs=[
                pl.BlockSpec((bB, S, D), lambda i: (i, 0, 0)),   # x: batch-blocked
                const2((S, D)),                                  # pe
                const2((D, 2 * D)), const2((1, 2 * D)),          # w_kv, b_kv
                const2((D, D)), const2((1, D)),                  # w_q, b_q (scaled)
                const2((H, D)),                                  # head selector
                const2((D, D)), const2((1, D)),                  # w_out, b_out
                const2((1, D)), const2((1, D)),                  # ln gamma / beta
                const2((D, CLS_PAD)), const2((1, CLS_PAD)),      # classifier (padded)
            ],
            out_specs=pl.BlockSpec((bB, CLS_PAD), lambda i: (i, 0)),
        ),
        compiler_params=pltpu.CompilerParams(
            dimension_semantics=("parallel",),          # shard batch over v7x's 2 TCs
            vmem_limit_bytes=32 * 1024 * 1024,
        ),
    )(emb, pe_slice,
      params["w_kv_t"], params["b_kv"],
      params["w_q_t"], params["b_q"],
      params["head_sel"],
      params["w_out_t"], params["b_out"],
      params["ln_g"], params["ln_b"],
      params["w_cls_pad"], params["b_cls_pad"])

    return out[:B, 0]                                   # (B,) == .squeeze(-1)


def reference_forward(tokens, tp):
    """Pure-JAX reference with the original full-sequence masked attention."""
    B, S = tokens.shape
    D, H, dh = D_MODEL, N_HEAD, HEAD_DIM
    x = tp["embedding"][tokens] + tp["pe"][MAX_LEN - S:, :][None]
    qkv = x @ tp["in_proj_weight"].T + tp["in_proj_bias"]
    q, k, v = qkv[..., :D], qkv[..., D:2 * D], qkv[..., 2 * D:]
    q = q.reshape(B, S, H, dh).transpose(0, 2, 1, 3)
    k = k.reshape(B, S, H, dh).transpose(0, 2, 1, 3)
    v = v.reshape(B, S, H, dh).transpose(0, 2, 1, 3)
    s = jnp.einsum('bhqd,bhkd->bhqk', q, k) / np.sqrt(dh)
    mask = jnp.triu(jnp.ones((S, S), bool), 1)
    s = jnp.where(mask[None, None], -1e30, s)
    p = jax.nn.softmax(s, axis=-1)
    ctx = jnp.einsum('bhqk,bhkd->bhqd', p, v).transpose(0, 2, 1, 3).reshape(B, S, D)
    attn = ctx @ tp["out_proj_weight"].T + tp["out_proj_bias"]
    mu = attn.mean(-1, keepdims=True)
    var = ((attn - mu) ** 2).mean(-1, keepdims=True)
    normed = (attn - mu) / jnp.sqrt(var + LN_EPS) * tp["ln_gamma"] + tp["ln_beta"]
    last = normed[:, -1, :]
    return (last @ tp["cls_weight"].T + tp["cls_bias"])[:, 0]


if __name__ == "__main__":
    key = jax.random.PRNGKey(0)
    k_tok, k_par = jax.random.split(key)

    VOCAB = 50
    B, S = 2, 8
    tokens = jax.random.randint(k_tok, (B, S), 0, VOCAB, dtype=jnp.int32)

    torch_params = init_torch_style_params(k_par, VOCAB)
    kparams = pack_kernel_params(torch_params)

    logits = attention_classifier_forward(tokens, kparams)
    logits = jax.block_until_ready(logits)
    assert logits.shape == (B,)

    ref = jax.block_until_ready(reference_forward(tokens, torch_params))
    # loose-ish tolerance only to accommodate the EUP approx reciprocal in softmax
    np.testing.assert_allclose(np.asarray(logits), np.asarray(ref),
                               rtol=1e-2, atol=1e-2)
    print("KERNEL_OK")
</pallas_src>

<mosaic_0001>
module attributes {stable_mosaic.version = 11 : i64} {
  func.func @attention_classifier_kernel(%arg0: i32, %arg1: memref<2x8x128xf32, #tpu.memory_space<vmem>>, %arg2: memref<8x128xf32, #tpu.memory_space<vmem>>, %arg3: memref<128x256xf32, #tpu.memory_space<vmem>>, %arg4: memref<1x256xf32, #tpu.memory_space<vmem>>, %arg5: memref<128x128xf32, #tpu.memory_space<vmem>>, %arg6: memref<1x128xf32, #tpu.memory_space<vmem>>, %arg7: memref<4x128xf32, #tpu.memory_space<vmem>>, %arg8: memref<128x128xf32, #tpu.memory_space<vmem>>, %arg9: memref<1x128xf32, #tpu.memory_space<vmem>>, %arg10: memref<1x128xf32, #tpu.memory_space<vmem>>, %arg11: memref<1x128xf32, #tpu.memory_space<vmem>>, %arg12: memref<128x128xf32, #tpu.memory_space<vmem>>, %arg13: memref<1x128xf32, #tpu.memory_space<vmem>>, %arg14: memref<2x128xf32, #tpu.memory_space<vmem>>) attributes {dimension_semantics = [#tpu.dimension_semantics<parallel>], iteration_bounds = array<i64: 1>, scalar_prefetch = 0 : i64, scratch_operands = 0 : i64, tpu.core_type = #tpu.core_type<tc>, window_params = [{transform_indices = @transform_0, window_bounds = array<i64: 2, 8, 128>}, {pipeline_mode = #tpu.pipeline_mode<synchronous>, transform_indices = @transform_1, window_bounds = array<i64: 8, 128>}, {pipeline_mode = #tpu.pipeline_mode<synchronous>, transform_indices = @transform_2, window_bounds = array<i64: 128, 256>}, {pipeline_mode = #tpu.pipeline_mode<synchronous>, transform_indices = @transform_3, window_bounds = array<i64: 1, 256>}, {pipeline_mode = #tpu.pipeline_mode<synchronous>, transform_indices = @transform_4, window_bounds = array<i64: 128, 128>}, {pipeline_mode = #tpu.pipeline_mode<synchronous>, transform_indices = @transform_5, window_bounds = array<i64: 1, 128>}, {pipeline_mode = #tpu.pipeline_mode<synchronous>, transform_indices = @transform_6, window_bounds = array<i64: 4, 128>}, {pipeline_mode = #tpu.pipeline_mode<synchronous>, transform_indices = @transform_7, window_bounds = array<i64: 128, 128>}, {pipeline_mode = #tpu.pipeline_mode<synchronous>, transform_indices = @transform_8, window_bounds = array<i64: 1, 128>}, {pipeline_mode = #tpu.pipeline_mode<synchronous>, transform_indices = @transform_9, window_bounds = array<i64: 1, 128>}, {pipeline_mode = #tpu.pipeline_mode<synchronous>, transform_indices = @transform_10, window_bounds = array<i64: 1, 128>}, {pipeline_mode = #tpu.pipeline_mode<synchronous>, transform_indices = @transform_11, window_bounds = array<i64: 128, 128>}, {pipeline_mode = #tpu.pipeline_mode<synchronous>, transform_indices = @transform_12, window_bounds = array<i64: 1, 128>}, {transform_indices = @transform_13, window_bounds = array<i64: 2, 128>}]} {
    %c0 = arith.constant 0 : index
    %c0_0 = arith.constant 0 : index
    %c0_1 = arith.constant 0 : index
    %0 = vector.load %arg1[%c0, %c0_0, %c0_1] : memref<2x8x128xf32, #tpu.memory_space<vmem>>, vector<2x8x128xf32>
    %c0_2 = arith.constant 0 : index
    %c0_3 = arith.constant 0 : index
    %1 = vector.load %arg2[%c0_2, %c0_3] : memref<8x128xf32, #tpu.memory_space<vmem>>, vector<8x128xf32>
    %2 = vector.shape_cast %1 : vector<8x128xf32> to vector<1x8x128xf32>
    %3 = vector.broadcast %2 : vector<1x8x128xf32> to vector<2x8x128xf32>
    %4 = arith.addf %0, %3 : vector<2x8x128xf32>
    %5 = vector.shape_cast %4 : vector<2x8x128xf32> to vector<16x128xf32>
    %c0_4 = arith.constant 0 : index
    %c0_5 = arith.constant 0 : index
    %6 = vector.load %arg3[%c0_4, %c0_5] : memref<128x256xf32, #tpu.memory_space<vmem>>, vector<128x256xf32>
    %cst = arith.constant dense<0.000000e+00> : vector<16x256xf32>
    %7 = tpu.matmul %5, %6, %cst {dimension_numbers = #tpu.dot_dimension_numbers<[1], [0], [0], [1], [0, 0, 1, 1], [], []>} : vector<16x128xf32>, vector<128x256xf32>, vector<16x256xf32> -> vector<16x256xf32>
    %c0_6 = arith.constant 0 : index
    %c0_7 = arith.constant 0 : index
    %8 = vector.load %arg4[%c0_6, %c0_7] : memref<1x256xf32, #tpu.memory_space<vmem>>, vector<1x256xf32>
    %9 = vector.broadcast %8 : vector<1x256xf32> to vector<16x256xf32>
    %10 = arith.addf %7, %9 : vector<16x256xf32>
    %11 = vector.extract_strided_slice %10 {offsets = [0, 0], sizes = [16, 128], strides = [1, 1]} : vector<16x256xf32> to vector<16x128xf32>
    %12 = vector.shape_cast %11 : vector<16x128xf32> to vector<2x8x128xf32>
    %13 = vector.extract_strided_slice %10 {offsets = [0, 128], sizes = [16, 128], strides = [1, 1]} : vector<16x256xf32> to vector<16x128xf32>
    %14 = vector.shape_cast %13 : vector<16x128xf32> to vector<2x8x128xf32>
    %15 = vector.extract_strided_slice %4 {offsets = [0, 7, 0], sizes = [2, 1, 128], strides = [1, 1, 1]} : vector<2x8x128xf32> to vector<2x1x128xf32>
    %16 = vector.shape_cast %15 : vector<2x1x128xf32> to vector<2x128xf32>
    %c0_8 = arith.constant 0 : index
    %c0_9 = arith.constant 0 : index
    %17 = vector.load %arg5[%c0_8, %c0_9] : memref<128x128xf32, #tpu.memory_space<vmem>>, vector<128x128xf32>
    %cst_10 = arith.constant dense<0.000000e+00> : vector<2x128xf32>
    %18 = tpu.matmul %16, %17, %cst_10 {dimension_numbers = #tpu.dot_dimension_numbers<[1], [0], [0], [1], [0, 0, 1, 1], [], []>} : vector<2x128xf32>, vector<128x128xf32>, vector<2x128xf32> -> vector<2x128xf32>
    %c0_11 = arith.constant 0 : index
    %c0_12 = arith.constant 0 : index
    %19 = vector.load %arg6[%c0_11, %c0_12] : memref<1x128xf32, #tpu.memory_space<vmem>>, vector<1x128xf32>
    %20 = vector.broadcast %19 : vector<1x128xf32> to vector<2x128xf32>
    %21 = arith.addf %18, %20 : vector<2x128xf32>
    %22 = vector.shape_cast %21 : vector<2x128xf32> to vector<2x1x128xf32>
    %c0_13 = arith.constant 0 : index
    %c0_14 = arith.constant 0 : index
    %23 = vector.load %arg7[%c0_13, %c0_14] : memref<4x128xf32, #tpu.memory_space<vmem>>, vector<4x128xf32>
    %24 = vector.shape_cast %23 : vector<4x128xf32> to vector<1x4x128xf32>
    %25 = vector.broadcast %22 : vector<2x1x128xf32> to vector<2x4x128xf32>
    %26 = vector.broadcast %24 : vector<1x4x128xf32> to vector<2x4x128xf32>
    %27 = arith.mulf %25, %26 : vector<2x4x128xf32>
    "tpu.trace_start"() <{level = 10 : i32, message = "bhd,bkd->bhk"}> : () -> ()
    %cst_15 = arith.constant dense<0.000000e+00> : vector<2x4x8xf32>
    %28 = tpu.matmul %27, %12, %cst_15 {dimension_numbers = #tpu.dot_dimension_numbers<[2], [2], [1], [1], [0, 0, 0, 1, 1, 1], [0], [0]>} : vector<2x4x128xf32>, vector<2x8x128xf32>, vector<2x4x8xf32> -> vector<2x4x8xf32>
    "tpu.trace_stop"() : () -> ()
    %cst_16 = arith.constant dense<0xFF800000> : vector<2x4xf32>
    %29 = vector.multi_reduction <maximumf>, %28, %cst_16 [2] : vector<2x4x8xf32> to vector<2x4xf32>
    %30 = vector.shape_cast %29 : vector<2x4xf32> to vector<2x4x1xf32>
    %31 = vector.broadcast %30 : vector<2x4x1xf32> to vector<2x4x8xf32>
    %32 = arith.subf %28, %31 : vector<2x4x8xf32>
    %33 = math.exp %32 : vector<2x4x8xf32>
    %cst_17 = arith.constant dense<0.000000e+00> : vector<2x4xf32>
    %34 = vector.multi_reduction <add>, %33, %cst_17 [2] : vector<2x4x8xf32> to vector<2x4xf32>
    %35 = vector.shape_cast %34 : vector<2x4xf32> to vector<2x4x1xf32>
    %36 = tpu.reciprocal %35 {approx = true} : vector<2x4x1xf32> -> vector<2x4x1xf32>
    %37 = vector.broadcast %36 : vector<2x4x1xf32> to vector<2x4x8xf32>
    %38 = arith.mulf %33, %37 : vector<2x4x8xf32>
    "tpu.trace_start"() <{level = 10 : i32, message = "bhk,bkd->bhd"}> : () -> ()
    %cst_18 = arith.constant dense<0.000000e+00> : vector<2x4x128xf32>
    %39 = tpu.matmul %38, %14, %cst_18 {dimension_numbers = #tpu.dot_dimension_numbers<[2], [1], [1], [2], [0, 0, 0, 1, 1, 2], [0], [0]>} : vector<2x4x8xf32>, vector<2x8x128xf32>, vector<2x4x128xf32> -> vector<2x4x128xf32>
    "tpu.trace_stop"() : () -> ()
    %c0_19 = arith.constant 0 : index
    %c0_20 = arith.constant 0 : index
    %40 = vector.load %arg7[%c0_19, %c0_20] : memref<4x128xf32, #tpu.memory_space<vmem>>, vector<4x128xf32>
    %41 = vector.shape_cast %40 : vector<4x128xf32> to vector<1x4x128xf32>
    %42 = vector.broadcast %41 : vector<1x4x128xf32> to vector<2x4x128xf32>
    %43 = arith.mulf %39, %42 : vector<2x4x128xf32>
    %cst_21 = arith.constant dense<0.000000e+00> : vector<2x128xf32>
    %44 = vector.multi_reduction <add>, %43, %cst_21 [1] : vector<2x4x128xf32> to vector<2x128xf32>
    %c0_22 = arith.constant 0 : index
    %c0_23 = arith.constant 0 : index
    %45 = vector.load %arg8[%c0_22, %c0_23] : memref<128x128xf32, #tpu.memory_space<vmem>>, vector<128x128xf32>
    %cst_24 = arith.constant dense<0.000000e+00> : vector<2x128xf32>
    %46 = tpu.matmul %44, %45, %cst_24 {dimension_numbers = #tpu.dot_dimension_numbers<[1], [0], [0], [1], [0, 0, 1, 1], [], []>} : vector<2x128xf32>, vector<128x128xf32>, vector<2x128xf32> -> vector<2x128xf32>
    %c0_25 = arith.constant 0 : index
    %c0_26 = arith.constant 0 : index
    %47 = vector.load %arg9[%c0_25, %c0_26] : memref<1x128xf32, #tpu.memory_space<vmem>>, vector<1x128xf32>
    %48 = vector.broadcast %47 : vector<1x128xf32> to vector<2x128xf32>
    %49 = arith.addf %46, %48 : vector<2x128xf32>
    %cst_27 = arith.constant dense<0.000000e+00> : vector<2xf32>
    %50 = vector.multi_reduction <add>, %49, %cst_27 [1] : vector<2x128xf32> to vector<2xf32>
    %51 = vector.shape_cast %50 : vector<2xf32> to vector<2x1xf32>
    %cst_28 = arith.constant 1.280000e+02 : f32
    %52 = vector.broadcast %cst_28 : f32 to vector<2x1xf32>
    %53 = arith.divf %51, %52 : vector<2x1xf32>
    %54 = vector.broadcast %53 : vector<2x1xf32> to vector<2x128xf32>
    %55 = arith.subf %49, %54 : vector<2x128xf32>
    %56 = arith.mulf %55, %55 : vector<2x128xf32>
    %cst_29 = arith.constant dense<0.000000e+00> : vector<2xf32>
    %57 = vector.multi_reduction <add>, %56, %cst_29 [1] : vector<2x128xf32> to vector<2xf32>
    %58 = vector.shape_cast %57 : vector<2xf32> to vector<2x1xf32>
    %cst_30 = arith.constant 1.280000e+02 : f32
    %59 = vector.broadcast %cst_30 : f32 to vector<2x1xf32>
    %60 = arith.divf %58, %59 : vector<2x1xf32>
    %61 = vector.broadcast %53 : vector<2x1xf32> to vector<2x128xf32>
    %62 = arith.subf %49, %61 : vector<2x128xf32>
    %cst_31 = arith.constant 9.99999974E-6 : f32
    %63 = vector.broadcast %cst_31 : f32 to vector<2x1xf32>
    %64 = arith.addf %60, %63 : vector<2x1xf32>
    %65 = math.rsqrt %64 : vector<2x1xf32>
    %66 = vector.broadcast %65 : vector<2x1xf32> to vector<2x128xf32>
    %67 = arith.mulf %62, %66 : vector<2x128xf32>
    %c0_32 = arith.constant 0 : index
    %c0_33 = arith.constant 0 : index
    %68 = vector.load %arg10[%c0_32, %c0_33] : memref<1x128xf32, #tpu.memory_space<vmem>>, vector<1x128xf32>
    %69 = vector.broadcast %68 : vector<1x128xf32> to vector<2x128xf32>
    %70 = arith.mulf %67, %69 : vector<2x128xf32>
    %c0_34 = arith.constant 0 : index
    %c0_35 = arith.constant 0 : index
    %71 = vector.load %arg11[%c0_34, %c0_35] : memref<1x128xf32, #tpu.memory_space<vmem>>, vector<1x128xf32>
    %72 = vector.broadcast %71 : vector<1x128xf32> to vector<2x128xf32>
    %73 = arith.addf %70, %72 : vector<2x128xf32>
    %c0_36 = arith.constant 0 : index
    %c0_37 = arith.constant 0 : index
    %74 = vector.load %arg12[%c0_36, %c0_37] : memref<128x128xf32, #tpu.memory_space<vmem>>, vector<128x128xf32>
    %cst_38 = arith.constant dense<0.000000e+00> : vector<2x128xf32>
    %75 = tpu.matmul %73, %74, %cst_38 {dimension_numbers = #tpu.dot_dimension_numbers<[1], [0], [0], [1], [0, 0, 1, 1], [], []>} : vector<2x128xf32>, vector<128x128xf32>, vector<2x128xf32> -> vector<2x128xf32>
    %c0_39 = arith.constant 0 : index
    %c0_40 = arith.constant 0 : index
    %76 = vector.load %arg13[%c0_39, %c0_40] : memref<1x128xf32, #tpu.memory_space<vmem>>, vector<1x128xf32>
    %77 = vector.broadcast %76 : vector<1x128xf32> to vector<2x128xf32>
    %78 = arith.addf %75, %77 : vector<2x128xf32>
    %c0_41 = arith.constant 0 : index
    %c0_42 = arith.constant 0 : index
    %79 = vector.load %arg14[%c0_41, %c0_42] : memref<2x128xf32, #tpu.memory_space<vmem>>, vector<2x128xf32>
    tpu.vector_store %arg14[%c0_41, %c0_42], %78 {strides = array<i32>} : memref<2x128xf32, #tpu.memory_space<vmem>>, vector<2x128xf32>,
    return
  }
  func.func @transform_0(%arg0: i32) -> (i32, i32, i32) {
    %c0_i32 = arith.constant 0 : i32
    %c0_i32_0 = arith.constant 0 : i32
    %c0_i32_1 = arith.constant 0 : i32
    return %arg0, %c0_i32, %c0_i32_0 : i32, i32, i32
  }
  func.func @transform_1(%arg0: i32) -> (i32, i32) {
    %c0_i32 = arith.constant 0 : i32
    %c0_i32_0 = arith.constant 0 : i32
    %c0_i32_1 = arith.constant 0 : i32
    return %c0_i32, %c0_i32_0 : i32, i32
  }
  func.func @transform_2(%arg0: i32) -> (i32, i32) {
    %c0_i32 = arith.constant 0 : i32
    %c0_i32_0 = arith.constant 0 : i32
    %c0_i32_1 = arith.constant 0 : i32
    return %c0_i32, %c0_i32_0 : i32, i32
  }
  func.func @transform_3(%arg0: i32) -> (i32, i32) {
    %c0_i32 = arith.constant 0 : i32
    %c0_i32_0 = arith.constant 0 : i32
    %c0_i32_1 = arith.constant 0 : i32
    return %c0_i32, %c0_i32_0 : i32, i32
  }
  func.func @transform_4(%arg0: i32) -> (i32, i32) {
    %c0_i32 = arith.constant 0 : i32
    %c0_i32_0 = arith.constant 0 : i32
    %c0_i32_1 = arith.constant 0 : i32
    return %c0_i32, %c0_i32_0 : i32, i32
  }
  func.func @transform_5(%arg0: i32) -> (i32, i32) {
    %c0_i32 = arith.constant 0 : i32
    %c0_i32_0 = arith.constant 0 : i32
    %c0_i32_1 = arith.constant 0 : i32
    return %c0_i32, %c0_i32_0 : i32, i32
  }
  func.func @transform_6(%arg0: i32) -> (i32, i32) {
    %c0_i32 = arith.constant 0 : i32
    %c0_i32_0 = arith.constant 0 : i32
    %c0_i32_1 = arith.constant 0 : i32
    return %c0_i32, %c0_i32_0 : i32, i32
  }
  func.func @transform_7(%arg0: i32) -> (i32, i32) {
    %c0_i32 = arith.constant 0 : i32
    %c0_i32_0 = arith.constant 0 : i32
    %c0_i32_1 = arith.constant 0 : i32
    return %c0_i32, %c0_i32_0 : i32, i32
  }
  func.func @transform_8(%arg0: i32) -> (i32, i32) {
    %c0_i32 = arith.constant 0 : i32
    %c0_i32_0 = arith.constant 0 : i32
    %c0_i32_1 = arith.constant 0 : i32
    return %c0_i32, %c0_i32_0 : i32, i32
  }
  func.func @transform_9(%arg0: i32) -> (i32, i32) {
    %c0_i32 = arith.constant 0 : i32
    %c0_i32_0 = arith.constant 0 : i32
    %c0_i32_1 = arith.constant 0 : i32
    return %c0_i32, %c0_i32_0 : i32, i32
  }
  func.func @transform_10(%arg0: i32) -> (i32, i32) {
    %c0_i32 = arith.constant 0 : i32
    %c0_i32_0 = arith.constant 0 : i32
    %c0_i32_1 = arith.constant 0 : i32
    return %c0_i32, %c0_i32_0 : i32, i32
  }
  func.func @transform_11(%arg0: i32) -> (i32, i32) {
    %c0_i32 = arith.constant 0 : i32
    %c0_i32_0 = arith.constant 0 : i32
    %c0_i32_1 = arith.constant 0 : i32
    return %c0_i32, %c0_i32_0 : i32, i32
  }
  func.func @transform_12(%arg0: i32) -> (i32, i32) {
    %c0_i32 = arith.constant 0 : i32
    %c0_i32_0 = arith.constant 0 : i32
    %c0_i32_1 = arith.constant 0 : i32
    return %c0_i32, %c0_i32_0 : i32, i32
  }
  func.func @transform_13(%arg0: i32) -> (i32, i32) {
    %c0_i32 = arith.constant 0 : i32
    %c0_i32_0 = arith.constant 0 : i32
    return %arg0, %c0_i32 : i32, i32
  }
}

</mosaic_0001>

<llo_original>
// kernel: tpu_custom_call.1
$region0: #{tpu_custom_call.1}
  #allocation0 [shape = 'u32[]', space=smem, size = 0x4, offset = 0x4, fixed_abs, tag = 'smem constant byte address 0x4 - core index']
  #allocation1 [shape = 'u32[72,128]{1,0:T(1,128)}', space=vmem, size = 0x9000, scoped, tag = 'internal scratch']
  %s0 = inlined_call_operand.hbm [shape: f32[2,8,128], index: 0, kind: input, shape index: {}]
  %s1 = inlined_call_operand.hbm [shape: f32[8,128], index: 1, kind: input, shape index: {}]
  %s2 = inlined_call_operand.hbm [shape: f32[128,256], index: 2, kind: input, shape index: {}]
  %s3 = inlined_call_operand.hbm [shape: f32[1,256], index: 3, kind: input, shape index: {}]
  %s4 = inlined_call_operand.hbm [shape: f32[128,128], index: 4, kind: input, shape index: {}]
  %s5 = inlined_call_operand.vmem [shape: f32[1,128], index: 5, kind: input, shape index: {}]
  %s6 = inlined_call_operand.vmem [shape: f32[4,128], index: 6, kind: input, shape index: {}]
  %s7 = inlined_call_operand.hbm [shape: f32[128,128], index: 7, kind: input, shape index: {}]
  %s8 = inlined_call_operand.vmem [shape: f32[1,128], index: 8, kind: input, shape index: {}]
  %s9 = inlined_call_operand.vmem [shape: f32[1,128], index: 9, kind: input, shape index: {}]
  %s10 = inlined_call_operand.vmem [shape: f32[1,128], index: 10, kind: input, shape index: {}]
  %s11 = inlined_call_operand.hbm [shape: f32[128,128], index: 11, kind: input, shape index: {}]
  %s12 = inlined_call_operand.vmem [shape: f32[1,128], index: 12, kind: input, shape index: {}]
  %s13 = inlined_call_operand.hbm [shape: f32[2,128], index: 13, kind: output, shape index: {}]
  %s14 = sld [smem:[#allocation0]]
  $region90: #{tpu_custom_call.1} parent=0
    _
  %s16 = ssub.s32 1, %s14
  %s17 = scalar_select 0, %s16, %s14
  $region1: #{tpu_custom_call.1} parent=0
    #allocation2 [shape = 'u8[8192]{0}', space=vmem, size = 0x2000, scoped, tag = 'input window, operand 0, single buffered']
    #allocation3 [shape = 's32[1]{0}', space=sflag, size = 0x4, scoped, tag = 'scoped memory for tpu_custom_call.1']
    #allocation4 [shape = 's32[1]{0}', space=sflag, size = 0x4, scoped, tag = 'scoped memory for tpu_custom_call.1']
    #allocation5 [shape = 'u8[4096]{0}', space=vmem, size = 0x1000, scoped, tag = 'input window, operand 1, single buffered']
    #allocation6 [shape = 's32[1]{0}', space=sflag, size = 0x4, scoped, tag = 'scoped memory for tpu_custom_call.1']
    #allocation7 [shape = 'u8[131072]{0}', space=vmem, size = 0x20000, scoped, tag = 'input window, operand 2, single buffered']
    #allocation8 [shape = 'u8[1024]{0}', space=vmem, size = 0x400, scoped, tag = 'input window, operand 3, single buffered']
    #allocation9 [shape = 's32[1]{0}', space=sflag, size = 0x4, scoped, tag = 'scoped memory for tpu_custom_call.1']
    #allocation10 [shape = 'u8[65536]{0}', space=vmem, size = 0x10000, scoped, tag = 'input window, operand 4, single buffered']
    #allocation11 [shape = 'u8[65536]{0}', space=vmem, size = 0x10000, scoped, tag = 'input window, operand 7, single buffered']
    #allocation12 [shape = 's32[1]{0}', space=sflag, size = 0x4, scoped, tag = 'scoped memory for tpu_custom_call.1']
    #allocation13 [shape = 'u8[65536]{0}', space=vmem, size = 0x10000, scoped, tag = 'input window, operand 11, single buffered']
    #allocation14 [shape = 'u8[1024]{0}', space=vmem, size = 0x400, scoped, tag = 'output window, operand 0, single buffered']
    %18 = vsyncpa [#allocation3], 0
    %19 = vsyncpa [#allocation6], 0
    %20 = vsyncpa [#allocation9], 0
    %21 = vsyncpa [#allocation12], 0
    %22 = vsyncpa [#allocation4], 0
    // Predicated region
    $region2: #{tpu_custom_call.1} parent=1 // pred_check
      _
    $region3: #{tpu_custom_call.1} parent=1 // pred_check_branch
      %24 = sbr.rel (0) target = $region5
    $region4: #{tpu_custom_call.1} parent=1 // pred_region
      %26 = vsyncadd [#allocation3], 0
      %s27 = sshll.u32 %s0, 4
      %s28 = int_to_ptr.hbm [resolvable:$true] %s27
      %s29 = sshll.u32 [#allocation2], 4
      %s30 = int_to_ptr.vmem [resolvable:$true] %s29
      %35 = dma.hbm_to_vmem [thread:$0]  %s28, 256, %s30, [#allocation3], 128, 128, 8
    $region5: #{tpu_custom_call.1} parent=1 // pred_fallthru
      _
    // Predicated region
    $region6: #{tpu_custom_call.1} parent=1 // pred_check
      _
    $region7: #{tpu_custom_call.1} parent=1 // pred_check_branch
      %37 = sbr.rel (0) target = $region9
    $region8: #{tpu_custom_call.1} parent=1 // pred_region
      %39 = vsyncadd [#allocation6], 0
      %s41 = sshll.u32 %s1, 4
      %s42 = int_to_ptr.hbm [resolvable:$true] %s41
      %s43 = sshll.u32 [#allocation5], 4
      %s44 = int_to_ptr.vmem [resolvable:$true] %s43
      %46 = dma.hbm_to_vmem [thread:$0]  %s42, 128, %s44, [#allocation6]
    $region9: #{tpu_custom_call.1} parent=1 // pred_fallthru
      _
    // Predicated region
    $region10: #{tpu_custom_call.1} parent=1 // pred_check
      _
    $region11: #{tpu_custom_call.1} parent=1 // pred_check_branch
      %48 = sbr.rel (0) target = $region13
    $region12: #{tpu_custom_call.1} parent=1 // pred_region
      %50 = vsyncadd [#allocation6], 0
      %s51 = sshll.u32 %s2, 4
      %s52 = int_to_ptr.hbm [resolvable:$true] %s51
      %s53 = sshll.u32 [#allocation7], 4
      %s54 = int_to_ptr.vmem [resolvable:$true] %s53
      %59 = dma.hbm_to_vmem [thread:$0]  %s52, 4096, %s54, [#allocation6], 256, 256, 16
    $region13: #{tpu_custom_call.1} parent=1 // pred_fallthru
      _
    // Predicated region
    $region14: #{tpu_custom_call.1} parent=1 // pred_check
      _
    $region15: #{tpu_custom_call.1} parent=1 // pred_check_branch
      %61 = sbr.rel (0) target = $region17
    $region16: #{tpu_custom_call.1} parent=1 // pred_region
      %63 = vsyncadd [#allocation9], 0
      %s65 = sshll.u32 %s3, 4
      %s66 = int_to_ptr.hbm [resolvable:$true] %s65
      %s67 = sshll.u32 [#allocation8], 4
      %s68 = int_to_ptr.vmem [resolvable:$true] %s67
      %70 = dma.hbm_to_vmem [thread:$0]  %s66, 32, %s68, [#allocation9]
    $region17: #{tpu_custom_call.1} parent=1 // pred_fallthru
      _
    // Predicated region
    $region18: #{tpu_custom_call.1} parent=1 // pred_check
      _
    $region19: #{tpu_custom_call.1} parent=1 // pred_check_branch
      %72 = sbr.rel (0) target = $region21
    $region20: #{tpu_custom_call.1} parent=1 // pred_region
      %74 = vsyncadd [#allocation9], 0
      %s75 = sshll.u32 %s4, 4
      %s76 = int_to_ptr.hbm [resolvable:$true] %s75
      %s77 = sshll.u32 [#allocation10], 4
      %s78 = int_to_ptr.vmem [resolvable:$true] %s77
      %83 = dma.hbm_to_vmem [thread:$0]  %s76, 2048, %s78, [#allocation9], 128, 128, 8
    $region21: #{tpu_custom_call.1} parent=1 // pred_fallthru
      _
    // Predicated region
    $region22: #{tpu_custom_call.1} parent=1 // pred_check
      _
    $region23: #{tpu_custom_call.1} parent=1 // pred_check_branch
      %85 = sbr.rel (0) target = $region25
    $region24: #{tpu_custom_call.1} parent=1 // pred_region
      _
    $region25: #{tpu_custom_call.1} parent=1 // pred_fallthru
      _
    // Predicated region
    $region26: #{tpu_custom_call.1} parent=1 // pred_check
      _
    $region27: #{tpu_custom_call.1} parent=1 // pred_check_branch
      %87 = sbr.rel (0) target = $region29
    $region28: #{tpu_custom_call.1} parent=1 // pred_region
      _
    $region29: #{tpu_custom_call.1} parent=1 // pred_fallthru
      _
    // Predicated region
    $region30: #{tpu_custom_call.1} parent=1 // pred_check
      _
    $region31: #{tpu_custom_call.1} parent=1 // pred_check_branch
      %89 = sbr.rel (0) target = $region33
    $region32: #{tpu_custom_call.1} parent=1 // pred_region
      %91 = vsyncadd [#allocation12], 0
      %s92 = sshll.u32 %s7, 4
      %s93 = int_to_ptr.hbm [resolvable:$true] %s92
      %s94 = sshll.u32 [#allocation11], 4
      %s95 = int_to_ptr.vmem [resolvable:$true] %s94
      %100 = dma.hbm_to_vmem [thread:$0]  %s93, 2048, %s95, [#allocation12], 128, 128, 8
    $region33: #{tpu_custom_call.1} parent=1 // pred_fallthru
      _
    // Predicated region
    $region34: #{tpu_custom_call.1} parent=1 // pred_check
      _
    $region35: #{tpu_custom_call.1} parent=1 // pred_check_branch
      %102 = sbr.rel (0) target = $region37
    $region36: #{tpu_custom_call.1} parent=1 // pred_region
      _
    $region37: #{tpu_custom_call.1} parent=1 // pred_fallthru
      _
    // Predicated region
    $region38: #{tpu_custom_call.1} parent=1 // pred_check
      _
    $region39: #{tpu_custom_call.1} parent=1 // pred_check_branch
      %104 = sbr.rel (0) target = $region41
    $region40: #{tpu_custom_call.1} parent=1 // pred_region
      _
    $region41: #{tpu_custom_call.1} parent=1 // pred_fallthru
      _
    // Predicated region
    $region42: #{tpu_custom_call.1} parent=1 // pred_check
      _
    $region43: #{tpu_custom_call.1} parent=1 // pred_check_branch
      %106 = sbr.rel (0) target = $region45
    $region44: #{tpu_custom_call.1} parent=1 // pred_region
      _
    $region45: #{tpu_custom_call.1} parent=1 // pred_fallthru
      _
    // Predicated region
    $region46: #{tpu_custom_call.1} parent=1 // pred_check
      _
    $region47: #{tpu_custom_call.1} parent=1 // pred_check_branch
      %108 = sbr.rel (0) target = $region49
    $region48: #{tpu_custom_call.1} parent=1 // pred_region
      %110 = vsyncadd [#allocation12], 0
      %s111 = sshll.u32 %s11, 4
      %s112 = int_to_ptr.hbm [resolvable:$true] %s111
      %s113 = sshll.u32 [#allocation13], 4
      %s114 = int_to_ptr.vmem [resolvable:$true] %s113
      %119 = dma.hbm_to_vmem [thread:$0]  %s112, 2048, %s114, [#allocation12], 128, 128, 8
    $region49: #{tpu_custom_call.1} parent=1 // pred_fallthru
      _
    // Predicated region
    $region50: #{tpu_custom_call.1} parent=1 // pred_check
      _
    $region51: #{tpu_custom_call.1} parent=1 // pred_check_branch
      %121 = sbr.rel (0) target = $region53
    $region52: #{tpu_custom_call.1} parent=1 // pred_region
      _
    $region53: #{tpu_custom_call.1} parent=1 // pred_fallthru
      _
    // Predicated region
    $region54: #{tpu_custom_call.1} parent=1 // pred_check
      _
    $region55: #{tpu_custom_call.1} parent=1 // pred_check_branch
      %123 = sbr.rel (0) target = $region57
    $region56: #{tpu_custom_call.1} parent=1 // pred_region
      %125 = dma.done [#allocation3], 256
    $region57: #{tpu_custom_call.1} parent=1 // pred_fallthru
      _
    // Predicated region
    $region58: #{tpu_custom_call.1} parent=1 // pred_check
      _
    $region59: #{tpu_custom_call.1} parent=1 // pred_check_branch
      %127 = sbr.rel (0) target = $region61
    $region60: #{tpu_custom_call.1} parent=1 // pred_region
      %129 = dma.done [#allocation6], 128
    $region61: #{tpu_custom_call.1} parent=1 // pred_fallthru
      _
    // Predicated region
    $region62: #{tpu_custom_call.1} parent=1 // pred_check
      _
    $region63: #{tpu_custom_call.1} parent=1 // pred_check_branch
      %131 = sbr.rel (0) target = $region65
    $region64: #{tpu_custom_call.1} parent=1 // pred_region
      %133 = dma.done [#allocation6], 4096
    $region65: #{tpu_custom_call.1} parent=1 // pred_fallthru
      _
    // Predicated region
    $region66: #{tpu_custom_call.1} parent=1 // pred_check
      _
    $region67: #{tpu_custom_call.1} parent=1 // pred_check_branch
      %135 = sbr.rel (0) target = $region69
    $region68: #{tpu_custom_call.1} parent=1 // pred_region
      %137 = dma.done [#allocation9], 32
    $region69: #{tpu_custom_call.1} parent=1 // pred_fallthru
      _
    // Predicated region
    $region70: #{tpu_custom_call.1} parent=1 // pred_check
      _
    $region71: #{tpu_custom_call.1} parent=1 // pred_check_branch
      %139 = sbr.rel (0) target = $region73
    $region72: #{tpu_custom_call.1} parent=1 // pred_region
      %141 = dma.done [#allocation9], 2048
    $region73: #{tpu_custom_call.1} parent=1 // pred_fallthru
      _
    // Predicated region
    $region74: #{tpu_custom_call.1} parent=1 // pred_check
      _
    $region75: #{tpu_custom_call.1} parent=1 // pred_check_branch
      %143 = sbr.rel (0) target = $region77
    $region76: #{tpu_custom_call.1} parent=1 // pred_region
      %145 = dma.done [#allocation12], 2048
    $region77: #{tpu_custom_call.1} parent=1 // pred_fallthru
      _
    // Predicated region
    $region78: #{tpu_custom_call.1} parent=1 // pred_check
      _
    $region79: #{tpu_custom_call.1} parent=1 // pred_check_branch
      %147 = sbr.rel (0) target = $region81
    $region80: #{tpu_custom_call.1} parent=1 // pred_region
      %149 = dma.done [#allocation12], 2048
    $region81: #{tpu_custom_call.1} parent=1 // pred_fallthru
      _
    %v150 = vld [vmem:[#allocation2] sm:$0xff]
    %v151 = vld [vmem:[#allocation2 + $0x8] sm:$0xff]
    %v152 = vld [vmem:[#allocation5] sm:$0xff]
    %v153 = vadd.f32 %v150, %v152
    %v154 = vadd.f32 %v151, %v152
    %v155 = vld [vmem:[#allocation7] sm:$0xff]
    %v156 = vld [vmem:[#allocation7 + $0x8] sm:$0xff]
    %v157 = vld [vmem:[#allocation7 + $0x10] sm:$0xff]
    %v158 = vld [vmem:[#allocation7 + $0x18] sm:$0xff]
    %v159 = vld [vmem:[#allocation7 + $0x20] sm:$0xff]
    %v160 = vld [vmem:[#allocation7 + $0x28] sm:$0xff]
    %v161 = vld [vmem:[#allocation7 + $0x30] sm:$0xff]
    %v162 = vld [vmem:[#allocation7 + $0x38] sm:$0xff]
    %v163 = vld [vmem:[#allocation7 + $0x40] sm:$0xff]
    %v164 = vld [vmem:[#allocation7 + $0x48] sm:$0xff]
    %v165 = vld [vmem:[#allocation7 + $0x50] sm:$0xff]
    %v166 = vld [vmem:[#allocation7 + $0x58] sm:$0xff]
    %v167 = vld [vmem:[#allocation7 + $0x60] sm:$0xff]
    %v168 = vld [vmem:[#allocation7 + $0x68] sm:$0xff]
    %v169 = vld [vmem:[#allocation7 + $0x70] sm:$0xff]
    %v170 = vld [vmem:[#allocation7 + $0x78] sm:$0xff]
    %v171 = vld [vmem:[#allocation7 + $0x80] sm:$0xff]
    %v172 = vld [vmem:[#allocation7 + $0x88] sm:$0xff]
    %v173 = vld [vmem:[#allocation7 + $0x90] sm:$0xff]
    %v174 = vld [vmem:[#allocation7 + $0x98] sm:$0xff]
    %v175 = vld [vmem:[#allocation7 + $0xa0] sm:$0xff]
    %v176 = vld [vmem:[#allocation7 + $0xa8] sm:$0xff]
    %v177 = vld [vmem:[#allocation7 + $0xb0] sm:$0xff]
    %v178 = vld [vmem:[#allocation7 + $0xb8] sm:$0xff]
    %v179 = vld [vmem:[#allocation7 + $0xc0] sm:$0xff]
    %v180 = vld [vmem:[#allocation7 + $0xc8] sm:$0xff]
    %v181 = vld [vmem:[#allocation7 + $0xd0] sm:$0xff]
    %v182 = vld [vmem:[#allocation7 + $0xd8] sm:$0xff]
    %v183 = vld [vmem:[#allocation7 + $0xe0] sm:$0xff]
    %v184 = vld [vmem:[#allocation7 + $0xe8] sm:$0xff]
    %v185 = vld [vmem:[#allocation7 + $0xf0] sm:$0xff]
    %v186 = vld [vmem:[#allocation7 + $0xf8] sm:$0xff]
    %v187 = vld [vmem:[#allocation8] sm:$0x3]
    %v189 = vperm.slane %v187, 0
    %v190 = vperm.slane %v187, 1
    %193 = vmatpush.msra.mxu0 %v185
    %194 = vmatpush.msra.mxu0 %v183
    %195 = vmatpush.msra.mxu0 %v181
    %196 = vmatpush.msra.mxu0 %v179
    %197 = vmatpush.msra.mxu0 %v177
    %198 = vmatpush.msra.mxu0 %v175
    %199 = vmatpush.msra.mxu0 %v173
    %200 = vmatpush.msra.mxu0 %v171
    %201 = vmatpush.msra.mxu0 %v169
    %202 = vmatpush.msra.mxu0 %v167
    %203 = vmatpush.msra.mxu0 %v165
    %204 = vmatpush.msra.mxu0 %v163
    %205 = vmatpush.msra.mxu0 %v161
    %206 = vmatpush.msra.mxu0 %v159
    %207 = vmatpush.msra.mxu0 %v157
    %208 = vmatpush.msra.mxu0 %v155
    %209 = vmatmul.f32.gmra.mxu0 %v153
    %v210 = vpop.f32.mrf.mxu0
    %v211 = vadd.f32 %v189, %v210
    %212 = vmatmul.f32.gmra.mxu0 %v154
    %v213 = vpop.f32.mrf.mxu0
    %v214 = vadd.f32 %v189, %v213
    %215 = vdwg.mxu0
    %216 = vmatpush.msra.mxu0 %v186
    %217 = vmatpush.msra.mxu0 %v184
    %218 = vmatpush.msra.mxu0 %v182
    %219 = vmatpush.msra.mxu0 %v180
    %220 = vmatpush.msra.mxu0 %v178
    %221 = vmatpush.msra.mxu0 %v176
    %222 = vmatpush.msra.mxu0 %v174
    %223 = vmatpush.msra.mxu0 %v172
    %224 = vmatpush.msra.mxu0 %v170
    %225 = vmatpush.msra.mxu0 %v168
    %226 = vmatpush.msra.mxu0 %v166
    %227 = vmatpush.msra.mxu0 %v164
    %228 = vmatpush.msra.mxu0 %v162
    %229 = vmatpush.msra.mxu0 %v160
    %230 = vmatpush.msra.mxu0 %v158
    %231 = vmatpush.msra.mxu0 %v156
    %232 = vmatmul.f32.gmra.mxu0 %v153
    %v233 = vpop.f32.mrf.mxu0
    %v234 = vadd.f32 %v190, %v233
    %235 = vmatmul.f32.gmra.mxu0 %v154
    %v236 = vpop.f32.mrf.mxu0
    %v237 = vadd.f32 %v190, %v236
    %238 = vdwg.mxu0
    %v239 = vld [vmem:[#allocation10] sm:$0xff]
    %v240 = vld [vmem:[#allocation10 + $0x8] sm:$0xff]
    %v241 = vld [vmem:[#allocation10 + $0x10] sm:$0xff]
    %v242 = vld [vmem:[#allocation10 + $0x18] sm:$0xff]
    %v243 = vld [vmem:[#allocation10 + $0x20] sm:$0xff]
    %v244 = vld [vmem:[#allocation10 + $0x28] sm:$0xff]
    %v245 = vld [vmem:[#allocation10 + $0x30] sm:$0xff]
    %v246 = vld [vmem:[#allocation10 + $0x38] sm:$0xff]
    %v247 = vld [vmem:[#allocation10 + $0x40] sm:$0xff]
    %v248 = vld [vmem:[#allocation10 + $0x48] sm:$0xff]
    %v249 = vld [vmem:[#allocation10 + $0x50] sm:$0xff]
    %v250 = vld [vmem:[#allocation10 + $0x58] sm:$0xff]
    %v251 = vld [vmem:[#allocation10 + $0x60] sm:$0xff]
    %v252 = vld [vmem:[#allocation10 + $0x68] sm:$0xff]
    %v253 = vld [vmem:[#allocation10 + $0x70] sm:$0xff]
    %v254 = vld [vmem:[#allocation10 + $0x78] sm:$0xff]
    %v255 = vld [vmem:[%s5] sm:$0x1]
    %v257 = vperm.slane %v255, 0
    %v261 = vrot.slane %v153, 7
    %v262 = vrot.slane %v154, 6
    %vm263 = vcmask 1041409
    %v264 = vsel %vm263, %v262, %v261
    %266 = vmatpush.msra.mxu0 %v254
    %267 = vmatpush.msra.mxu0 %v253
    %268 = vmatpush.msra.mxu0 %v252
    %269 = vmatpush.msra.mxu0 %v251
    %270 = vmatpush.msra.mxu0 %v250
    %271 = vmatpush.msra.mxu0 %v249
    %272 = vmatpush.msra.mxu0 %v248
    %273 = vmatpush.msra.mxu0 %v247
    %274 = vmatpush.msra.mxu0 %v246
    %275 = vmatpush.msra.mxu0 %v245
    %276 = vmatpush.msra.mxu0 %v244
    %277 = vmatpush.msra.mxu0 %v243
    %278 = vmatpush.msra.mxu0 %v242
    %279 = vmatpush.msra.mxu0 %v241
    %280 = vmatpush.msra.mxu0 %v240
    %281 = vmatpush.msra.mxu0 %v239
    %282 = vmatmul.f32.gmra.mxu0 %v264
    %v283 = vpop.f32.mrf.mxu0
    %v284 = vadd.f32 %v257, %v283
    %285 = vdwg.mxu0
    %v287 = vrot.slane %v284, 1
    %v288 = vld [vmem:[%s6] sm:$0xf]
    %v289 = vperm.slane %v284, 0
    %v290 = vperm.slane %v287, 0
    %v293 = vmul.f32 %v289, %v288
    %v294 = vmul.f32 %v290, %v288
    %295 = vmatpush.xpose.msra.mxu0 0.0
    %296 = vmatpush.xpose.msra.mxu0 0.0
    %297 = vmatpush.xpose.msra.mxu0 0.0
    %298 = vmatpush.xpose.msra.mxu0 0.0
    %299 = vmatpush.xpose.msra.mxu0 0.0
    %300 = vmatpush.xpose.msra.mxu0 0.0
    %301 = vmatpush.xpose.msra.mxu0 0.0
    %302 = vmatpush.xpose.msra.mxu0 0.0
    %303 = vmatpush.xpose.msra.mxu0 0.0
    %304 = vmatpush.xpose.msra.mxu0 0.0
    %305 = vmatpush.xpose.msra.mxu0 0.0
    %306 = vmatpush.xpose.msra.mxu0 0.0
    %307 = vmatpush.xpose.msra.mxu0 0.0
    %308 = vmatpush.xpose.msra.mxu0 0.0
    %309 = vmatpush.xpose.msra.mxu0 0.0
    %310 = vmatpush.xpose.msra.mxu0 %v211
    %311 = vmatmul.f32.gmra.mxu0 %v293
    %v312 = vpop.f32.mrf.mxu0
    %v313 = vadd.f32 0.0, %v312
    %314 = vdwg.mxu0
    %315 = vmatpush.xpose.msra.mxu0 0.0
    %316 = vmatpush.xpose.msra.mxu0 0.0
    %317 = vmatpush.xpose.msra.mxu0 0.0
    %318 = vmatpush.xpose.msra.mxu0 0.0
    %319 = vmatpush.xpose.msra.mxu0 0.0
    %320 = vmatpush.xpose.msra.mxu0 0.0
    %321 = vmatpush.xpose.msra.mxu0 0.0
    %322 = vmatpush.xpose.msra.mxu0 0.0
    %323 = vmatpush.xpose.msra.mxu0 0.0
    %324 = vmatpush.xpose.msra.mxu0 0.0
    %325 = vmatpush.xpose.msra.mxu0 0.0
    %326 = vmatpush.xpose.msra.mxu0 0.0
    %327 = vmatpush.xpose.msra.mxu0 0.0
    %328 = vmatpush.xpose.msra.mxu0 0.0
    %329 = vmatpush.xpose.msra.mxu0 0.0
    %330 = vmatpush.xpose.msra.mxu0 %v214
    %331 = vmatmul.f32.gmra.mxu0 %v294
    %v332 = vpop.f32.mrf.mxu0
    %v333 = vadd.f32 0.0, %v332
    %334 = vdwg.mxu0
    %vm335 = vcmask 60416
    %v336 = vsel %vm335, %v313, -inf
    %337 = vmax.xlane.f32.xlu0 %v336
    %v338 = vpop.xlane.xlu0 %337
    %v339 = vsel %vm335, %v333, -inf
    %340 = vmax.xlane.f32.xlu0 %v339
    %v341 = vpop.xlane.xlu0 %340
    %v342 = vsub.f32 %v313, %v338
    %v343 = vsub.f32 %v333, %v341
    %v344 = vmul.f32 %v342, 1.442695
    %v345 = vpow.pop %v344
    %v346 = vmul.f32 %v343, 1.442695
    %v347 = vpow.pop %v346
    %v348 = vsel %vm335, %v345, 0.0
    %349 = vadd.xlane.f32.xlu0 %v348
    %v350 = vpop.xlane.xlu0 %349
    %v351 = vsel %vm335, %v347, 0.0
    %352 = vadd.xlane.f32.xlu0 %v351
    %v353 = vpop.xlane.xlu0 %352
    %v354 = vrcp.pop %v350
    %v355 = vrcp.pop %v353
    %v356 = vmul.f32 %v345, %v354
    %v357 = vmul.f32 %v347, %v355
    %vm358 = vcmask 64512
    %v360 = vsel %vm358, %v356, 0
    %362 = vmatpush.msra.mxu0 0.0
    %363 = vmatpush.msra.mxu0 0.0
    %364 = vmatpush.msra.mxu0 0.0
    %365 = vmatpush.msra.mxu0 0.0
    %366 = vmatpush.msra.mxu0 0.0
    %367 = vmatpush.msra.mxu0 0.0
    %368 = vmatpush.msra.mxu0 0.0
    %369 = vmatpush.msra.mxu0 0.0
    %370 = vmatpush.msra.mxu0 0.0
    %371 = vmatpush.msra.mxu0 0.0
    %372 = vmatpush.msra.mxu0 0.0
    %373 = vmatpush.msra.mxu0 0.0
    %374 = vmatpush.msra.mxu0 0.0
    %375 = vmatpush.msra.mxu0 0.0
    %376 = vmatpush.msra.mxu0 0.0
    %377 = vmatpush.msra.mxu0 %v234
    %378 = vmatmul.f32.gmra.mxu0 %v360
    %v379 = vpop.f32.mrf.mxu0
    %v380 = vadd.f32 0.0, %v379
    %381 = vdwg.mxu0
    %v383 = vsel %vm358, %v357, 0
    %385 = vmatpush.msra.mxu0 0.0
    %386 = vmatpush.msra.mxu0 0.0
    %387 = vmatpush.msra.mxu0 0.0
    %388 = vmatpush.msra.mxu0 0.0
    %389 = vmatpush.msra.mxu0 0.0
    %390 = vmatpush.msra.mxu0 0.0
    %391 = vmatpush.msra.mxu0 0.0
    %392 = vmatpush.msra.mxu0 0.0
    %393 = vmatpush.msra.mxu0 0.0
    %394 = vmatpush.msra.mxu0 0.0
    %395 = vmatpush.msra.mxu0 0.0
    %396 = vmatpush.msra.mxu0 0.0
    %397 = vmatpush.msra.mxu0 0.0
    %398 = vmatpush.msra.mxu0 0.0
    %399 = vmatpush.msra.mxu0 0.0
    %400 = vmatpush.msra.mxu0 %v237
    %401 = vmatmul.f32.gmra.mxu0 %v383
    %v402 = vpop.f32.mrf.mxu0
    %v403 = vadd.f32 0.0, %v402
    %404 = vdwg.mxu0
    %v405 = vld [vmem:[%s6] sm:$0xf]
    %v406 = vmul.f32 %v380, %v405
    %v407 = vmul.f32 %v403, %v405
    %vm408 = vcmask 1043456
    %v409 = vsel %vm408, %v406, 0.0
    %v410 = vrot.slane %v409, 4
    %v411 = vadd.f32 %v409, %v410
    %v412 = vrot.slane %v411, 2
    %v413 = vadd.f32 %v411, %v412
    %v414 = vrot.slane %v413, 1
    %v415 = vadd.f32 %v413, %v414
    %v416 = vsel %vm408, %v407, 0.0
    %v417 = vrot.slane %v416, 4
    %v418 = vadd.f32 %v416, %v417
    %v419 = vrot.slane %v418, 2
    %v420 = vadd.f32 %v418, %v419
    %v421 = vrot.slane %v420, 1
    %v422 = vadd.f32 %v420, %v421
    %v423 = vld [vmem:[#allocation11] sm:$0xff]
    %v424 = vld [vmem:[#allocation11 + $0x8] sm:$0xff]
    %v425 = vld [vmem:[#allocation11 + $0x10] sm:$0xff]
    %v426 = vld [vmem:[#allocation11 + $0x18] sm:$0xff]
    %v427 = vld [vmem:[#allocation11 + $0x20] sm:$0xff]
    %v428 = vld [vmem:[#allocation11 + $0x28] sm:$0xff]
    %v429 = vld [vmem:[#allocation11 + $0x30] sm:$0xff]
    %v430 = vld [vmem:[#allocation11 + $0x38] sm:$0xff]
    %v431 = vld [vmem:[#allocation11 + $0x40] sm:$0xff]
    %v432 = vld [vmem:[#allocation11 + $0x48] sm:$0xff]
    %v433 = vld [vmem:[#allocation11 + $0x50] sm:$0xff]
    %v434 = vld [vmem:[#allocation11 + $0x58] sm:$0xff]
    %v435 = vld [vmem:[#allocation11 + $0x60] sm:$0xff]
    %v436 = vld [vmem:[#allocation11 + $0x68] sm:$0xff]
    %v437 = vld [vmem:[#allocation11 + $0x70] sm:$0xff]
    %v438 = vld [vmem:[#allocation11 + $0x78] sm:$0xff]
    %v439 = vld [vmem:[%s8] sm:$0x1]
    %v441 = vperm.slane %v439, 0
    %v445 = vsel %vm263, %v422, %v415
    %447 = vmatpush.msra.mxu0 %v438
    %448 = vmatpush.msra.mxu0 %v437
    %449 = vmatpush.msra.mxu0 %v436
    %450 = vmatpush.msra.mxu0 %v435
    %451 = vmatpush.msra.mxu0 %v434
    %452 = vmatpush.msra.mxu0 %v433
    %453 = vmatpush.msra.mxu0 %v432
    %454 = vmatpush.msra.mxu0 %v431
    %455 = vmatpush.msra.mxu0 %v430
    %456 = vmatpush.msra.mxu0 %v429
    %457 = vmatpush.msra.mxu0 %v428
    %458 = vmatpush.msra.mxu0 %v427
    %459 = vmatpush.msra.mxu0 %v426
    %460 = vmatpush.msra.mxu0 %v425
    %461 = vmatpush.msra.mxu0 %v424
    %462 = vmatpush.msra.mxu0 %v423
    %463 = vmatmul.f32.gmra.mxu0 %v445
    %v464 = vpop.f32.mrf.mxu0
    %v465 = vadd.f32 %v441, %v464
    %466 = vdwg.mxu0
    %vm467 = vcmask 1041408
    %v468 = vsel %vm467, %v465, 0.0
    %469 = vadd.xlane.f32.xlu0 %v468
    %v470 = vpop.xlane.xlu0 %469
    %v471 = vrcp.pop 128.0
    %v472 = vmul.f32 128.0, %v471
    %v473 = vsub.f32 1.0, %v472
    %v474 = vmul.f32 %v471, %v473
    %v475 = vadd.f32 %v471, %v474
    %vm476 = vweird.f32 %v471
    %v477 = vsel %vm476, %v471, %v475
    %v478 = vmul.f32 %v470, %v477
    %v479 = vsub.f32 %v465, %v478
    %v480 = vmul.f32 %v479, %v479
    %v481 = vsel %vm467, %v480, 0.0
    %482 = vadd.xlane.f32.xlu0 %v481
    %v483 = vpop.xlane.xlu0 %482
    %v484 = vmul.f32 %v483, %v477
    %v485 = vadd.f32 %v484, 1e-05
    %v486 = vrsqrt.pop %v485
    %v487 = vmul.f32 %v486, %v485
    %v488 = vmul.f32 %v487, %v486
    %v489 = vmul.f32 0.5, %v488
    %v490 = vsub.f32 1.5, %v489
    %v491 = vmul.f32 %v486, %v490
    %vm492 = vweird.f32 %v485
    %vm493 = vweird.f32 %v486
    %vm494 = vmor %vm492, %vm493
    %v495 = vsel %vm494, %v486, %v491
    %v496 = vmul.f32 %v479, %v495
    %v497 = vld [vmem:[%s9] sm:$0x1]
    %v499 = vperm.slane %v497, 0
    %v501 = vmul.f32 %v496, %v499
    %v502 = vld [vmem:[%s10] sm:$0x1]
    %v504 = vperm.slane %v502, 0
    %v506 = vadd.f32 %v501, %v504
    %v507 = vld [vmem:[#allocation13] sm:$0xff]
    %v508 = vld [vmem:[#allocation13 + $0x8] sm:$0xff]
    %v509 = vld [vmem:[#allocation13 + $0x10] sm:$0xff]
    %v510 = vld [vmem:[#allocation13 + $0x18] sm:$0xff]
    %v511 = vld [vmem:[#allocation13 + $0x20] sm:$0xff]
    %v512 = vld [vmem:[#allocation13 + $0x28] sm:$0xff]
    %v513 = vld [vmem:[#allocation13 + $0x30] sm:$0xff]
    %v514 = vld [vmem:[#allocation13 + $0x38] sm:$0xff]
    %v515 = vld [vmem:[#allocation13 + $0x40] sm:$0xff]
    %v516 = vld [vmem:[#allocation13 + $0x48] sm:$0xff]
    %v517 = vld [vmem:[#allocation13 + $0x50] sm:$0xff]
    %v518 = vld [vmem:[#allocation13 + $0x58] sm:$0xff]
    %v519 = vld [vmem:[#allocation13 + $0x60] sm:$0xff]
    %v520 = vld [vmem:[#allocation13 + $0x68] sm:$0xff]
    %v521 = vld [vmem:[#allocation13 + $0x70] sm:$0xff]
    %v522 = vld [vmem:[#allocation13 + $0x78] sm:$0xff]
    %v523 = vld [vmem:[%s12] sm:$0x1]
    %v525 = vperm.slane %v523, 0
    %527 = vmatpush.msra.mxu0 %v522
    %528 = vmatpush.msra.mxu0 %v521
    %529 = vmatpush.msra.mxu0 %v520
    %530 = vmatpush.msra.mxu0 %v519
    %531 = vmatpush.msra.mxu0 %v518
    %532 = vmatpush.msra.mxu0 %v517
    %533 = vmatpush.msra.mxu0 %v516
    %534 = vmatpush.msra.mxu0 %v515
    %535 = vmatpush.msra.mxu0 %v514
    %536 = vmatpush.msra.mxu0 %v513
    %537 = vmatpush.msra.mxu0 %v512
    %538 = vmatpush.msra.mxu0 %v511
    %539 = vmatpush.msra.mxu0 %v510
    %540 = vmatpush.msra.mxu0 %v509
    %541 = vmatpush.msra.mxu0 %v508
    %542 = vmatpush.msra.mxu0 %v507
    %543 = vmatmul.f32.gmra.mxu0 %v506
    %v544 = vpop.f32.mrf.mxu0
    %v545 = vadd.f32 %v525, %v544
    %546 = vdwg.mxu0
    %547 = vst [vmem:[#allocation14] sm:$0x3] %v545
    // Predicated region
    $region82: #{tpu_custom_call.1} parent=1 // pred_check
      _
    $region83: #{tpu_custom_call.1} parent=1 // pred_check_branch
      %549 = sbr.rel (0) target = $region85
    $region84: #{tpu_custom_call.1} parent=1 // pred_region
      %551 = vsyncadd [#allocation4], 0
      %s553 = sshll.u32 [#allocation14], 4
      %s554 = int_to_ptr.vmem [resolvable:$true] %s553
      %s555 = sshll.u32 %s13, 4
      %s556 = int_to_ptr.hbm [resolvable:$true] %s555
      %558 = dma.vmem_to_hbm [thread:$0]  %s554, 32, %s556, [#allocation4]
    $region85: #{tpu_custom_call.1} parent=1 // pred_fallthru
      _
    // Predicated region
    $region86: #{tpu_custom_call.1} parent=1 // pred_check
      _
    $region87: #{tpu_custom_call.1} parent=1 // pred_check_branch
      %560 = sbr.rel (0) target = $region89
    $region88: #{tpu_custom_call.1} parent=1 // pred_region
      %562 = dma.done [#allocation4], 32
    $region89: #{tpu_custom_call.1} parent=1 // pred_fallthru
      _
    %563 = vsyncpa [#allocation3], 1
    %564 = vsyncpa [#allocation6], 1
    %565 = vsyncpa [#allocation9], 1
    %566 = vsyncpa [#allocation12], 1
    %567 = vsyncpa [#allocation4], 1

</llo_original>
